<compile_context>
chip_gen: v7x
topology: tpu7x:2x2x1
jax: 0.10.0
libtpu: 0.0.40
codegen_flags: <defaults>
</compile_context>

<pallas_src>
import functools

import jax
import jax.numpy as jnp
from jax import lax
from jax.experimental import pallas as pl
from jax.experimental.pallas import tpu as pltpu


def _color_sum_kernel(x_ref, o_ref, *, H, W, n_h_p, mask_h, mask_w):
    """Accumulates per-image, per-channel spatial sums into o_ref (1,1,TB,3)."""
    p = pl.program_id(0)          # H-range partition (small-batch v7x split)
    h = pl.program_id(2)          # H-block within this partition
    w = pl.program_id(3)          # W-block

    # The output block stays resident across the whole (h, w) reduction sweep:
    # zero it at the start of the sweep and accumulate into it directly.
    @pl.when((h == 0) & (w == 0))
    def _():
        o_ref[...] = jnp.zeros_like(o_ref)

    _, _, TH, TW = x_ref.shape
    x = x_ref[...].astype(jnp.float32)                    # (TB, 3, TH, TW)

    # Mask ragged spatial tails (and phantom h-blocks of the partition split)
    # in-kernel instead of padding the input in HBM.
    if mask_h or mask_w:
        valid = None
        if mask_h:
            gh = p * n_h_p + h                            # global h-block index
            vh = H - gh * TH                              # <= 0 for phantom blocks
            ih = lax.broadcasted_iota(jnp.int32, (TH, TW), 0)
            valid = ih < vh
        if mask_w:
            vw = W - w * TW
            iw = lax.broadcasted_iota(jnp.int32, (TH, TW), 1)
            mw = iw < vw
            valid = mw if valid is None else valid & mw
        x = jnp.where(valid, x, 0.0)

    s = jnp.sum(jnp.sum(x, axis=3), axis=2)               # (TB, 3) channel sums
    o_ref[0, 0] += s


def color_loss(x, *, target_block_bytes=4 * 1024 * 1024, max_tw=2048):
    """x: (B, 3, H, W) floating NCHW. Returns (B, 1, 1, 1) float32."""
    B, C, H, W = x.shape
    if C != 3:
        raise ValueError("ColorLoss expects exactly 3 channels (r, g, b)")
    itemsize = jnp.dtype(x.dtype).itemsize

    # ---- lane (W) tile: full W when modest, else a multiple of 128 ----------
    max_tw = max(128, (max_tw // 128) * 128)
    TW = W if W <= max_tw else max_tw
    tw_pad = -(-TW // 128) * 128

    # ---- sublane (H) tile: fill the per-step byte budget --------------------
    bytes_per_h = 3 * tw_pad * itemsize
    th_want = max(1, target_block_bytes // bytes_per_h)
    if H <= th_want:
        TH = H
    else:
        TH = max(8, (th_want // 8) * 8)
    th_pad = -(-TH // 8) * 8

    n_h_total = -(-H // TH)
    n_w = -(-W // TW)

    # ---- batch tile: several whole images per block when images are small ---
    TB = 1
    if n_h_total == 1 and n_w == 1 and B > 1:
        img_bytes = 3 * th_pad * tw_pad * itemsize
        # keep >= 2 batch blocks so the "parallel" axis can shard across TCs
        TB = int(max(1, min(target_block_bytes // img_bytes, -(-B // 2))))
    n_b = -(-B // TB)

    # ---- B == 1: split the H-block range 2 ways so both TCs get work --------
    P = 2 if (n_b == 1 and n_h_total >= 2) else 1
    n_h_p = -(-n_h_total // P)
    has_phantom = P * n_h_p != n_h_total

    mask_h = (H % TH != 0) or has_phantom
    mask_w = (W % TW) != 0

    def x_index(p, b, h, w):
        gh = p * n_h_p + h
        if has_phantom:
            gh = jnp.minimum(gh, n_h_total - 1)   # keep phantom-block DMA in bounds
        return (b, 0, gh, w)

    kernel = functools.partial(
        _color_sum_kernel, H=H, W=W, n_h_p=n_h_p, mask_h=mask_h, mask_w=mask_w
    )

    cost = pl.CostEstimate(
        flops=2 * B * 3 * H * W,
        transcendentals=0,
        bytes_accessed=B * 3 * H * W * itemsize + P * n_b * TB * 3 * 4,
    )

    sums = pl.pallas_call(
        kernel,
        out_shape=jax.ShapeDtypeStruct((P, n_b, TB, 3), jnp.float32),
        grid_spec=pltpu.PrefetchScalarGridSpec(
            num_scalar_prefetch=0,
            grid=(P, n_b, n_h_p, n_w),             # reduction axes (h, w) last
            in_specs=[pl.BlockSpec((TB, 3, TH, TW), x_index)],
            out_specs=pl.BlockSpec((1, 1, TB, 3), lambda p, b, h, w: (p, b, 0, 0)),
        ),
        compiler_params=pltpu.CompilerParams(
            dimension_semantics=("parallel", "parallel", "arbitrary", "arbitrary"),
            vmem_limit_bytes=32 * 1024 * 1024,
        ),
        cost_estimate=cost,
    )(x)

    # Tiny epilogue on a (B, 3) array in plain JAX (per review): combine the
    # per-partition partial sums, take the true spatial mean, Dr/Dg/Db, sqrt.
    ch_sums = jnp.sum(sums, axis=0).reshape(n_b * TB, 3)[:B]       # (B, 3)
    mean_rgb = ch_sums * (1.0 / float(H * W))
    d = (mean_rgb - 0.5) ** 2
    k = jnp.sqrt(jnp.sum(d * d, axis=1))
    return k.reshape(B, 1, 1, 1)


def _reference(x):
    mean_rgb = jnp.mean(x.astype(jnp.float32), axis=(2, 3), keepdims=True)
    mr = mean_rgb[:, 0:1]
    mg = mean_rgb[:, 1:2]
    mb = mean_rgb[:, 2:3]
    Dr = (mr - 0.5) ** 2
    Dg = (mg - 0.5) ** 2
    Db = (mb - 0.5) ** 2
    return jnp.sqrt(Dr**2 + Dg**2 + Db**2)


if __name__ == "__main__":
    key = jax.random.PRNGKey(0)
    k1, k2, k3, k4 = jax.random.split(key, 4)

    # 1) Basic small NCHW input.
    x1 = jax.random.uniform(k1, (2, 3, 16, 16), dtype=jnp.float32)
    out1 = jax.block_until_ready(color_loss(x1))
    assert out1.shape == (2, 1, 1, 1)
    assert jnp.allclose(out1, _reference(x1), rtol=1e-4, atol=1e-6), (out1, _reference(x1))

    # 2) Larger batch: several whole images per block (TB > 1).
    x2 = 0.8 * jax.random.uniform(k2, (10, 3, 24, 40), dtype=jnp.float32)
    out2 = jax.block_until_ready(color_loss(x2))
    assert jnp.allclose(out2, _reference(x2), rtol=1e-4, atol=1e-6)

    # 3) Batch of one with a tiled, ragged H axis: exercises the 2-way H
    #    partition (both v7x TCs) and the in-kernel H-tail mask.
    x3 = 0.35 * jax.random.uniform(k3, (1, 3, 60, 144), dtype=jnp.float32)
    out3 = jax.block_until_ready(color_loss(x3, target_block_bytes=32 * 1024))
    assert jnp.allclose(out3, _reference(x3), rtol=1e-4, atol=1e-6)

    # 4) Ragged W tiles: exercises the in-kernel lane (W) tail mask.
    x4 = 0.6 * jax.random.uniform(k4, (2, 3, 20, 200), dtype=jnp.float32)
    out4 = jax.block_until_ready(color_loss(x4, max_tw=128))
    assert jnp.allclose(out4, _reference(x4), rtol=1e-4, atol=1e-6)

    print("KERNEL_OK")
</pallas_src>

<mosaic_0001>
module attributes {stable_mosaic.version = 11 : i64} {
  func.func @_color_sum_kernel(%arg0: i32, %arg1: i32, %arg2: i32, %arg3: i32, %arg4: memref<1x3x16x16xf32, #tpu.memory_space<vmem>>, %arg5: memref<1x1x1x3xf32, #tpu.memory_space<vmem>>) attributes {dimension_semantics = [#tpu.dimension_semantics<parallel>, #tpu.dimension_semantics<parallel>, #tpu.dimension_semantics<arbitrary>, #tpu.dimension_semantics<arbitrary>], iteration_bounds = array<i64: 1, 2, 1, 1>, scalar_prefetch = 0 : i64, scratch_operands = 0 : i64, tpu.core_type = #tpu.core_type<tc>, window_params = [{transform_indices = @transform_0, window_bounds = array<i64: 1, 3, 16, 16>}, {transform_indices = @transform_1, window_bounds = array<i64: 1, 1, 1, 3>}]} {
    %c0_i32 = arith.constant 0 : i32
    %0 = arith.cmpi eq, %arg2, %c0_i32 : i32
    %c0_i32_0 = arith.constant 0 : i32
    %1 = arith.cmpi eq, %arg3, %c0_i32_0 : i32
    %2 = arith.andi %0, %1 : i1
    %3 = arith.extui %2 : i1 to i32
    %c0_i32_1 = arith.constant 0 : i32
    %4 = arith.cmpi ne, %3, %c0_i32_1 : i32
    scf.if %4 {
      %cst_14 = arith.constant 0.000000e+00 : f32
      %14 = vector.broadcast %cst_14 : f32 to vector<1x1x1x3xf32>
      %c0_15 = arith.constant 0 : index
      %c0_16 = arith.constant 0 : index
      %c0_17 = arith.constant 0 : index
      %c0_18 = arith.constant 0 : index
      %15 = vector.load %arg5[%c0_15, %c0_16, %c0_17, %c0_18] : memref<1x1x1x3xf32, #tpu.memory_space<vmem>>, vector<1x1x1x3xf32>
      tpu.vector_store %arg5[%c0_15, %c0_16, %c0_17, %c0_18], %14 {strides = array<i32>} : memref<1x1x1x3xf32, #tpu.memory_space<vmem>>, vector<1x1x1x3xf32>,
    } else {
    }
    %c0 = arith.constant 0 : index
    %c0_2 = arith.constant 0 : index
    %c0_3 = arith.constant 0 : index
    %c0_4 = arith.constant 0 : index
    %5 = vector.load %arg4[%c0, %c0_2, %c0_3, %c0_4] : memref<1x3x16x16xf32, #tpu.memory_space<vmem>>, vector<1x3x16x16xf32>
    %cst = arith.constant dense<0.000000e+00> : vector<1x3x16xf32>
    %6 = vector.multi_reduction <add>, %5, %cst [3] : vector<1x3x16x16xf32> to vector<1x3x16xf32>
    %cst_5 = arith.constant dense<0.000000e+00> : vector<1x3xf32>
    %7 = vector.multi_reduction <add>, %6, %cst_5 [2] : vector<1x3x16xf32> to vector<1x3xf32>
    %c0_6 = arith.constant 0 : index
    %c0_7 = arith.constant 0 : index
    %c0_8 = arith.constant 0 : index
    %c0_9 = arith.constant 0 : index
    %8 = vector.load %arg5[%c0_6, %c0_7, %c0_8, %c0_9] : memref<1x1x1x3xf32, #tpu.memory_space<vmem>>, vector<1x1x1x3xf32>
    %9 = vector.shape_cast %8 : vector<1x1x1x3xf32> to vector<1x3xf32>
    %10 = arith.addf %9, %7 : vector<1x3xf32>
    %c0_10 = arith.constant 0 : index
    %c0_11 = arith.constant 0 : index
    %c0_12 = arith.constant 0 : index
    %c0_13 = arith.constant 0 : index
    %11 = vector.load %arg5[%c0_10, %c0_11, %c0_12, %c0_13] : memref<1x1x1x3xf32, #tpu.memory_space<vmem>>, vector<1x1x1x3xf32>
    %12 = vector.shape_cast %11 : vector<1x1x1x3xf32> to vector<1x3xf32>
    %13 = vector.shape_cast %10 : vector<1x3xf32> to vector<1x1x1x3xf32>
    tpu.vector_store %arg5[%c0_10, %c0_11, %c0_12, %c0_13], %13 {strides = array<i32>} : memref<1x1x1x3xf32, #tpu.memory_space<vmem>>, vector<1x1x1x3xf32>,
    return
  }
  func.func @transform_0(%arg0: i32, %arg1: i32, %arg2: i32, %arg3: i32) -> (i32, i32, i32, i32) {
    %c1_i32 = arith.constant 1 : i32
    %0 = arith.muli %arg0, %c1_i32 : i32
    %1 = arith.addi %0, %arg2 : i32
    %c0_i32 = arith.constant 0 : i32
    %c0_i32_0 = arith.constant 0 : i32
    return %arg1, %c0_i32, %1, %arg3 : i32, i32, i32, i32
  }
  func.func @transform_1(%arg0: i32, %arg1: i32, %arg2: i32, %arg3: i32) -> (i32, i32, i32, i32) {
    %c0_i32 = arith.constant 0 : i32
    %c0_i32_0 = arith.constant 0 : i32
    %c0_i32_1 = arith.constant 0 : i32
    return %arg0, %arg1, %c0_i32, %c0_i32_0 : i32, i32, i32, i32
  }
}

</mosaic_0001>

<llo_original>
// kernel: tpu_custom_call.1
$region0: #{tpu_custom_call.1}
  #allocation0 [shape = 'u32[]', space=smem, size = 0x4, offset = 0x4, fixed_abs, tag = 'smem constant byte address 0x4 - core index']
  #allocation1 [shape = 'u32[144,128]{1,0:T(1,128)}', space=vmem, size = 0x12000, scoped, tag = 'internal scratch']
  %s0 = inlined_call_operand.hbm [shape: f32[2,3,16,16], index: 0, kind: input, shape index: {}]
  %s1 = inlined_call_operand.hbm [shape: f32[1,2,1,3], index: 1, kind: output, shape index: {}]
  %s2 = sld [smem:[#allocation0]]
  $region45: #{tpu_custom_call.1} parent=0
    _
  %s4 = ssub.s32 1, %s2
  %s5 = scalar_select 0, %s4, %s2
  $region1: #{tpu_custom_call.1} parent=0
    #allocation2 [shape = 'u8[49152]{0}', space=vmem, size = 0xc000, scoped, tag = 'input window, operand 0']
    #allocation3 [shape = 's32[2]{0}', space=sflag, size = 0x8, scoped, tag = 'scoped memory for tpu_custom_call.1']
    #allocation4 [shape = 's32[2]{0}', space=sflag, size = 0x8, scoped, tag = 'scoped memory for tpu_custom_call.1']
    #allocation5 [shape = 'u8[1024]{0}', space=vmem, size = 0x400, scoped, tag = 'output window, operand 0']
    %6 = vsyncpa [#allocation3], 0
    %s7 = scalar_lea.sflag [#allocation3], 1
    %8 = vsyncpa %s7, 0
    %9 = vsyncpa [#allocation4], 0
    %s10 = scalar_lea.sflag [#allocation4], 1
    %11 = vsyncpa %s10, 0
    loop: start=0, step=1, limit=4
    $region2: #{tpu_custom_call.1} parent=1 // loop_pre_header
      _
    $region3: #{tpu_custom_call.1} parent=1 // loop_header
      %s13 = sphi 0, %s17
      %p14 = scmp.ge.s32.totalorder %s13, 4
      %s20 = sphi 0, %s46
      %s21 = sphi 0, %s42
      %s22 = sphi 0, %s38
      %s23 = sphi 0, %s34
      %s24 = sphi 0, %s20
      %s25 = sphi 0, %s21
      %s26 = sphi 0, %s22
      %s27 = sphi 0, %s23
      %s28 = sphi 0, %s24
      %s29 = sphi 0, %s25
      %s30 = sphi 0, %s26
      %s31 = sphi 0, %s27
      %s55 = sphi 0, %s57
      %s58 = sphi 0, %s55
      %s59 = sphi 0, %s58
      %s75 = sphi 0, %s59
      %s83 = sphi 0, %s85
      %s86 = sphi 0, %s83
      %s87 = sphi 0, %s86
      %s103 = sphi 0, %s87
    $region4: #{tpu_custom_call.1} parent=1 // loop_header_branch
      %16 = sbr.rel (%p14) target = $region8
    $region5: #{tpu_custom_call.1} parent=1 // loop_body
      %s18 = ssub.s32 %s13, 1
      %s19 = ssub.s32 %s13, 2
      %s32 = sadd.s32 1, %s23
      %p33 = scmp.ge.s32.totalorder %s32, 1
      %s34 = scalar_select %p33, 0, %s32
      %s35 = sadd.s32 1, %s22
      %s36 = scalar_select %p33, %s35, %s22
      %p37 = scmp.ge.s32.totalorder %s36, 1
      %s38 = scalar_select %p37, 0, %s36
      %s39 = sadd.s32 1, %s21
      %s40 = scalar_select %p37, %s39, %s21
      %p41 = scmp.ge.s32.totalorder %s40, 2
      %s42 = scalar_select %p41, 0, %s40
      %s43 = sadd.s32 1, %s20
      %s44 = scalar_select %p41, %s43, %s20
      %p45 = scmp.ge.s32.totalorder %s44, 1
      %s46 = scalar_select %p45, 0, %s44
      %s47 = sadd.s32 %s20, %s22
      %s48 = sadd.s32 %s46, %s38
      %s49 = ssub.s32 %s21, %s42
      %s50 = ssub.s32 %s47, %s48
      %s51 = sor.u32 %s49, %s50
      %s52 = ssub.s32 %s23, %s34
      %s53 = sor.u32 %s51, %s52
      %p54 = scmp.eq.s32.totalorder %s53, 0
      %s56 = sadd.s32 %s55, 1
      %s57 = scalar_select %p54, %s55, %s56
      %p60 = pneg %p54
      %p61 = scmp.eq.s32.totalorder %s13, 1
      %p62 = por %p60, %p61
      %p63 = scmp.ne.s32.totalorder %s55, %s58
      %p64 = scmp.eq.s32.totalorder %s13, 0
      %p65 = por %p63, %p64
      %p66 = scmp.ne.s32.totalorder %s55, %s58
      %p67 = scmp.eq.s32.totalorder %s18, 1
      %p68 = por %p66, %p67
      %p69 = scmp.ne.s32.totalorder %s58, %s59
      %p70 = scmp.eq.s32.totalorder %s18, 0
      %p71 = por %p69, %p70
      %p72 = scmp.ne.s32.totalorder %s58, %s59
      %p73 = scmp.eq.s32.totalorder %s19, 1
      %p74 = por %p72, %p73
      %p76 = scmp.ne.s32.totalorder %s59, %s75
      %p77 = scmp.eq.s32.totalorder %s19, 0
      %p78 = por %p76, %p77
      %s79 = ssub.s32 %s20, %s46
      %s80 = ssub.s32 %s21, %s42
      %s81 = sor.u32 %s79, %s80
      %p82 = scmp.eq.s32.totalorder %s81, 0
      %s84 = sadd.s32 %s83, 1
      %s85 = scalar_select %p82, %s83, %s84
      %p88 = pneg %p82
      %p89 = scmp.eq.s32.totalorder %s13, 1
      %p90 = por %p88, %p89
      %p91 = scmp.ne.s32.totalorder %s83, %s86
      %p92 = scmp.eq.s32.totalorder %s13, 0
      %p93 = por %p91, %p92
      %p94 = scmp.ne.s32.totalorder %s83, %s86
      %p95 = scmp.eq.s32.totalorder %s18, 1
      %p96 = por %p94, %p95
      %p97 = scmp.ne.s32.totalorder %s86, %s87
      %p98 = scmp.eq.s32.totalorder %s18, 0
      %p99 = por %p97, %p98
      %p100 = scmp.ne.s32.totalorder %s86, %s87
      %p101 = scmp.eq.s32.totalorder %s19, 1
      %p102 = por %p100, %p101
      %p104 = scmp.ne.s32.totalorder %s87, %s103
      %p105 = scmp.eq.s32.totalorder %s19, 0
      %p106 = por %p104, %p105
      %p107 = scmp.le.s32.totalorder 1, %s13
      %p108 = scmp.lt.s32.totalorder %s13, 3
      %p109 = pnand %p107, %p108
      %p110 = pneg %p109
      // Predicated region
      $region9: #{tpu_custom_call.1} parent=5 // pred_check
        _
      $region10: #{tpu_custom_call.1} parent=5 // pred_check_branch
        %112 = sbr.rel (%p109) target = $region12
      $region11: #{tpu_custom_call.1} parent=5 // pred_region
        %s113 = ssub.s32 %s13, 1
      $region12: #{tpu_custom_call.1} parent=5 // pred_fallthru
        _
      %p114 = scmp.lt.s32.totalorder %s13, 2
      // Predicated region
      $region13: #{tpu_custom_call.1} parent=5 // pred_check
        %p115 = pneg %p114
      $region14: #{tpu_custom_call.1} parent=5 // pred_check_branch
        %117 = sbr.rel (%p115) target = $region16
      $region15: #{tpu_custom_call.1} parent=5 // pred_region
        // Predicated region
        $region17: #{tpu_custom_call.1} parent=15 // pred_check
          %p118 = pneg %p65
        $region18: #{tpu_custom_call.1} parent=15 // pred_check_branch
          %120 = sbr.rel (%p118) target = $region20
        $region19: #{tpu_custom_call.1} parent=15 // pred_region
          %s121 = sand.u32 %s55, 1
          %s122 = scalar_lea.sflag [#allocation3], %s121
          %s123 = sand.u32 %s55, 1
          %s124 = smul.addr %s123, 48
          %s125 = scalar_lea.vmem [#allocation2], %s124
          %s126 = sadd.s32 %s20, %s22
          %s127 = smul.u32 2, %s126
          %s129 = ssub.s32 768, 768
          %130 = vsyncadd %s122, %s129
          %s131 = sadd.s32 %s23, %s127
          %s132 = smul.addr %s21, 6
          %s133 = sadd.s32 %s131, %s132
          %s134 = smul.addr %s133, 128
          %s135 = scalar_lea.hbm %s0, %s134
          %s136 = sshll.u32 %s125, 4
          %s137 = int_to_ptr.vmem [resolvable:$true] %s136
          %142 = dma.hbm_to_vmem [thread:$0]  %s135, 768, %s137, %s122, 128, 128, 8
        $region20: #{tpu_custom_call.1} parent=15 // pred_fallthru
          _
      $region16: #{tpu_custom_call.1} parent=5 // pred_fallthru
        _
      %p143 = scmp.le.s32.totalorder 1, %s13
      %p144 = scmp.lt.s32.totalorder %s13, 3
      %p145 = pnand %p143, %p144
      %p146 = pneg %p145
      // Predicated region
      $region21: #{tpu_custom_call.1} parent=5 // pred_check
        _
      $region22: #{tpu_custom_call.1} parent=5 // pred_check_branch
        %148 = sbr.rel (%p145) target = $region24
      $region23: #{tpu_custom_call.1} parent=5 // pred_region
        %s149 = ssub.s32 %s13, 1
        %s150 = sand.u32 %s58, 1
        %s151 = scalar_lea.sflag [#allocation3], %s150
        %s152 = sand.u32 %s58, 1
        %s153 = smul.addr %s152, 48
        %s154 = scalar_lea.vmem [#allocation2], %s153
        // Predicated region
        $region25: #{tpu_custom_call.1} parent=23 // pred_check
          %p155 = pneg %p71
        $region26: #{tpu_custom_call.1} parent=23 // pred_check_branch
          %157 = sbr.rel (%p155) target = $region28
        $region27: #{tpu_custom_call.1} parent=23 // pred_region
          %158 = dma.done %s151, 768
        $region28: #{tpu_custom_call.1} parent=23 // pred_fallthru
          _
        %s159 = sand.u32 %s58, 1
        %s160 = scalar_lea.sflag [#allocation3], %s159
        %s161 = sand.u32 %s58, 1
        %s162 = smul.addr %s161, 48
        %s163 = scalar_lea.vmem [#allocation2], %s162
        %p164 = pneg %p71
        %p165 = pneg %p68
        %p166 = pneg %p99
        %p167 = pneg %p96
        %s168 = sand.u32 %s86, 1
        %s169 = scalar_lea.sflag [#allocation4], %s168
        %s170 = sand.u32 %s86, 1
        %s171 = scalar_lea.vmem [#allocation5], %s170
        %s172 = sadd.s32 %s24, %s26
        %s173 = smul.u32 2, %s172
        %p174 = scmp.eq.s32.totalorder %s26, 0
        %p175 = scmp.eq.s32.totalorder %s27, 0
        %p176 = pnand %p174, %p175
        %p177 = pneg %p176
        // Predicated region
        $region29: #{tpu_custom_call.1} parent=23 // pred_check
          _
        $region30: #{tpu_custom_call.1} parent=23 // pred_check_branch
          %179 = sbr.rel (%p176) target = $region32
        $region31: #{tpu_custom_call.1} parent=23 // pred_region
          %vm180 = vcmask 16384
          %181 = vst.msk [vmem:[%s171] sm:$0x1] %vm180, 0.0
        $region32: #{tpu_custom_call.1} parent=23 // pred_fallthru
          _
        %v182 = vld [vmem:[%s154] sm:$0xff]
        %v183 = vld [vmem:[%s154 + $0x8] sm:$0xff]
        %v184 = vld [vmem:[%s154 + $0x10] sm:$0xff]
        %v185 = vld [vmem:[%s154 + $0x18] sm:$0xff]
        %v186 = vld [vmem:[%s154 + $0x20] sm:$0xff]
        %v187 = vld [vmem:[%s154 + $0x28] sm:$0xff]
        %vm188 = vcmask 130048
        %v189 = vsel %vm188, %v182, 0.0
        %190 = vadd.xlane.f32.xlu0 %v189
        %v191 = vpop.xlane.xlu0 %190
        %v192 = vsel %vm188, %v183, 0.0
        %193 = vadd.xlane.f32.xlu0 %v192
        %v194 = vpop.xlane.xlu0 %193
        %v195 = vsel %vm188, %v184, 0.0
        %196 = vadd.xlane.f32.xlu0 %v195
        %v197 = vpop.xlane.xlu0 %196
        %v198 = vsel %vm188, %v185, 0.0
        %199 = vadd.xlane.f32.xlu0 %v198
        %v200 = vpop.xlane.xlu0 %199
        %v201 = vsel %vm188, %v186, 0.0
        %202 = vadd.xlane.f32.xlu0 %v201
        %v203 = vpop.xlane.xlu0 %202
        %v204 = vsel %vm188, %v187, 0.0
        %205 = vadd.xlane.f32.xlu0 %v204
        %v206 = vpop.xlane.xlu0 %205
        %v213 = vlaneseq
        %v214 = vand.u32 %v213, 127
        %v215 = vlaneseq
        %v216 = vshrl.u32 %v215, 7
        %v217 = vsub.s32 %v214, %v216
        %v218 = vrot.slane %v191, %v217
        %v219 = vadd.s32 %v214, 4294967288
        %v220 = vlaneseq
        %v221 = vshrl.u32 %v220, 7
        %v222 = vsub.s32 %v219, %v221
        %v223 = vrot.slane %v194, %v222
        %vm224 = vcmask 130112
        %v225 = vsel %vm224, %v223, %v218
        %v226 = vlaneseq
        %v227 = vshrl.u32 %v226, 7
        %v228 = vsub.s32 %v214, %v227
        %v229 = vrot.slane %v197, %v228
        %v230 = vlaneseq
        %v231 = vshrl.u32 %v230, 7
        %v232 = vsub.s32 %v219, %v231
        %v233 = vrot.slane %v200, %v232
        %v234 = vsel %vm224, %v233, %v229
        %v235 = vlaneseq
        %v236 = vshrl.u32 %v235, 7
        %v237 = vsub.s32 %v214, %v236
        %v238 = vrot.slane %v203, %v237
        %v239 = vlaneseq
        %v240 = vshrl.u32 %v239, 7
        %v241 = vsub.s32 %v219, %v240
        %v242 = vrot.slane %v206, %v241
        %v243 = vsel %vm224, %v242, %v238
        %vm244 = vcmask 1041409
        %v245 = vsel %vm244, %v234, %v225
        %vm246 = vcmask 1042434
        %v247 = vsel %vm246, %v243, %v245
        %vm249 = vcmask 124928
        %v250 = vsel %vm249, %v247, 0.0
        %251 = vadd.xlane.f32.xlu0 %v250
        %v252 = vpop.xlane.xlu0 %251
        %v253 = vld [vmem:[%s171] sm:$0x1]
        %v255 = vlaneseq
        %v256 = vshrl.u32 %v255, 7
        %v257 = vsub.s32 0, %v256
        %v258 = vrot.slane %v252, %v257
        %v259 = vlaneseq
        %v260 = vshrl.u32 %v259, 7
        %v261 = vsub.s32 1, %v260
        %v262 = vrot.slane %v252, %v261
        %v263 = vlaneseq
        %v264 = vshrl.u32 %v263, 7
        %v265 = vsub.s32 2, %v264
        %v266 = vrot.slane %v252, %v265
        %v267 = vcombine.low %v258, %v262
        %v269 = vunpack.c.l.s4 1966171168
        %v270 = vunpack.c.0.s8 %v269
        %v271 = vlaneseq
        %v272 = vshrl.u32 %v271, 7
        %v273 = vsub.s32 %v270, %v272
        %v274 = vrot.slane %v267, %v273
        %v276 = vunpack.c.l.s4 1966171168
        %v277 = vunpack.c.0.s8 %v276
        %v278 = vlaneseq
        %v279 = vshrl.u32 %v278, 7
        %v280 = vsub.s32 %v277, %v279
        %v281 = vrot.slane %v266, %v280
        %v282 = vcombine.low %v274, %v281
        %v284 = vunpack.c.l.s4 1966171168
        %v285 = vunpack.c.0.s8 %v284
        %v286 = vlaneseq
        %v287 = vshrl.u32 %v286, 7
        %v288 = vsub.s32 %v285, %v287
        %v289 = vrot.slane %v282, %v288
        %290 = vset.pattern.permute.xlu0 0
        %291 = vperm.xlu0 %290, %v289
        %v292 = vpop.permute.xlu0 %291
        %v293 = vlaneseq
        %v294 = vshrl.u32 %v293, 7
        %v295 = vsub.s32 %v214, %v294
        %v296 = vrot.slane %v292, %v295
        %v298 = vunpack.c.l.s4 1966171168
        %v299 = vunpack.c.0.s8 %v298
        %v300 = vlaneseq
        %v301 = vshrl.u32 %v300, 7
        %v302 = vsub.s32 %v299, %v301
        %v303 = vrot.slane %v296, %v302
        %v305 = vunpack.c.l.s4 1966171168
        %v306 = vunpack.c.0.s8 %v305
        %v307 = vlaneseq
        %v308 = vshrl.u32 %v307, 7
        %v309 = vsub.s32 %v306, %v308
        %v310 = vrot.slane %v303, %v309
        %v312 = vadd.f32 %v253, %v310
        %vm313 = vcmask 16384
        %314 = vst.msk [vmem:[%s171] sm:$0x1] %vm313, %v312
        %s315 = sand.u32 %s86, 1
        %s316 = scalar_lea.sflag [#allocation4], %s315
        %s317 = sand.u32 %s86, 1
        %s318 = scalar_lea.vmem [#allocation5], %s317
        // Predicated region
        $region33: #{tpu_custom_call.1} parent=23 // pred_check
          %p319 = pneg %p96
        $region34: #{tpu_custom_call.1} parent=23 // pred_check_branch
          %321 = sbr.rel (%p319) target = $region36
        $region35: #{tpu_custom_call.1} parent=23 // pred_region
          %s323 = ssub.s32 16, 16
          %324 = vsyncadd %s316, %s323
          %s325 = smul.addr %s24, 2
          %s326 = sadd.s32 %s25, %s325
          %s327 = smul.addr %s326, 16
          %s328 = scalar_lea.hbm %s1, %s327
          %s330 = sshll.u32 %s318, 4
          %s331 = int_to_ptr.vmem [resolvable:$true] %s330
          %333 = dma.vmem_to_hbm [thread:$0]  %s331, 16, %s328, %s316
        $region36: #{tpu_custom_call.1} parent=23 // pred_fallthru
          _
      $region24: #{tpu_custom_call.1} parent=5 // pred_fallthru
        _
      %p334 = scmp.le.s32.totalorder 2, %s13
      // Predicated region
      $region37: #{tpu_custom_call.1} parent=5 // pred_check
        %p335 = pneg %p334
      $region38: #{tpu_custom_call.1} parent=5 // pred_check_branch
        %337 = sbr.rel (%p335) target = $region40
      $region39: #{tpu_custom_call.1} parent=5 // pred_region
        %s338 = ssub.s32 %s13, 2
        // Predicated region
        $region41: #{tpu_custom_call.1} parent=39 // pred_check
          %p339 = pneg %p102
        $region42: #{tpu_custom_call.1} parent=39 // pred_check_branch
          %341 = sbr.rel (%p339) target = $region44
        $region43: #{tpu_custom_call.1} parent=39 // pred_region
          %s342 = sand.u32 %s87, 1
          %s343 = scalar_lea.sflag [#allocation4], %s342
          %s344 = sand.u32 %s87, 1
          %s345 = scalar_lea.vmem [#allocation5], %s344
          %346 = dma.done %s343, 16
        $region44: #{tpu_custom_call.1} parent=39 // pred_fallthru
          _
      $region40: #{tpu_custom_call.1} parent=5 // pred_fallthru
        _
    $region6: #{tpu_custom_call.1} parent=1 // loop_footer
      %s17 = sadd.s32 1, %s13
    $region7: #{tpu_custom_call.1} parent=1 // loop_footer_branch
      %12 = sbr.rel target = $region3
    $region8: #{tpu_custom_call.1} parent=1 // loop_exit
      _
    %347 = vsyncpa [#allocation3], 1
    %s348 = scalar_lea.sflag [#allocation3], 1
    %349 = vsyncpa %s348, 1
    %350 = vsyncpa [#allocation4], 1
    %s351 = scalar_lea.sflag [#allocation4], 1
    %352 = vsyncpa %s351, 1

</llo_original>
